<compile_context>
chip_gen: v6e
topology: v6e:2x2x1
jax: 0.10.0
libtpu: 0.0.40
codegen_flags: <defaults>
</compile_context>

<pallas_src>
import jax
import jax.numpy as jnp
from jax import lax
from jax.experimental import pallas as pl
from jax.experimental.pallas import tpu as pltpu


def _round_up(n, m):
    return ((n + m - 1) // m) * m


def _sigmoid(z):
    # sigmoid(z) = 0.5 * (tanh(z/2) + 1): a single native EUP transcendental
    # plus two cheap VALU ops (avoids a full-precision divide / Newton step).
    return 0.5 * jnp.tanh(0.5 * z) + 0.5


def _make_kernel(n_hid: int):
    def mann2_kernel(x_ref, w_in_ref, b_in_ref, w_hid_ref, w_out_ref, o_ref):
        # x_ref:     (TB, IN)      -- native batch-major input tile
        # w_in_ref:  (HP, IN)      b_in_ref: (HP, 1)
        # w_hid_ref: (L, HP, HP)   (biases folded into column H, see wrapper)
        # w_out_ref: (HP, 1)       (output bias folded into row H)
        # o_ref:     (1, TB)       -- lane-dense output

        # First layer as an "NT" matmul: contract the feature dims of (HP, IN)
        # and (TB, IN) -> (HP, TB).  Batch lands on the lane axis with no
        # wrapper-side transpose.
        z = lax.dot_general(
            w_in_ref[...], x_ref[...],
            dimension_numbers=(((1,), (1,)), ((), ())),
            preferred_element_type=jnp.float32) + b_in_ref[...]
        h = _sigmoid(z)

        # Hidden layers, statically unrolled (n_hid is a compile-time
        # constant): each layer is a single MXU dot -- the bias rides in weight
        # column H against the exact 0.5 carried by channel H of h.
        for l in range(n_hid):
            h = _sigmoid(jnp.dot(w_hid_ref[l], h,
                                 preferred_element_type=jnp.float32))

        # Final H -> 1 layer as a sublane (XLU) reduction; output bias folded
        # as 2*b against the 0.5 channel.  Keeps the (1, TB) lane-dense layout.
        logits = jnp.sum(w_out_ref[...] * h, axis=0, keepdims=True)
        o_ref[...] = _sigmoid(logits)

    return mann2_kernel


def mann2_forward(x, layers, *, block_b=None):
    """Forward pass of MaNN2.

    x:      (B, input_size) float32.
    layers: list of (W, b) in PyTorch nn.Linear layout (W: (out, in), b: (out,));
            layers[-1] maps hidden -> 1.
    Returns (B, 1) float32, matching the PyTorch module output.
    """
    B, in_size = x.shape
    num_layers = len(layers) - 1          # layers before the final H->1 layer
    n_hid = num_layers - 1                # hidden->hidden layers
    H = layers[0][0].shape[0]             # hidden_size

    # Pad the hidden width so there is always at least one spare channel
    # (index H).  That channel carries exactly sigmoid(0) = 0.5 through every
    # layer (its weight row and bias stay zero) and is used to fold biases
    # into the hidden / output matmuls.  All other padded rows/cols are zero.
    HP = _round_up(H + 1, 8)
    BIAS = H

    if block_b is None:
        # Large tiles amortize the ~0.35us/step grid overhead; keep >= 2 grid
        # steps when possible so both v7x TensorCores get work; cap at 2048
        # (safe for v5e's single vector-store slot and well under VMEM).
        block_b = max(128, min(2048, _round_up(pl.cdiv(B, 2), 128)))

    BP = _round_up(B, block_b)
    x_p = x if BP == B else jnp.pad(x, ((0, BP - B), (0, 0)))

    # ---- pack parameters (tiny; stay VMEM-resident via constant index maps) --
    W0, b0 = layers[0]
    w_in = jnp.zeros((HP, in_size), jnp.float32).at[:H, :].set(W0)
    b_in = jnp.zeros((HP, 1), jnp.float32).at[:H, 0].set(b0)

    n_stack = max(n_hid, 1)
    w_hid = jnp.zeros((n_stack, HP, HP), jnp.float32)
    for l in range(n_hid):
        W, b = layers[1 + l]
        w_hid = w_hid.at[l, :H, :H].set(W)
        w_hid = w_hid.at[l, :H, BIAS].set(2.0 * b)   # folded bias (hits the 0.5 channel)

    Wf, bf = layers[-1]                   # (1, H), (1,)
    w_out = jnp.zeros((HP, 1), jnp.float32).at[:H, 0].set(Wf[0])
    w_out = w_out.at[BIAS, 0].set(2.0 * bf[0])       # folded output bias

    grid = (BP // block_b,)
    out = pl.pallas_call(
        _make_kernel(n_hid),
        out_shape=jax.ShapeDtypeStruct((1, BP), jnp.float32),
        grid=grid,
        in_specs=[
            pl.BlockSpec((block_b, in_size), lambda i: (i, 0)),      # x (tiled, native layout)
            pl.BlockSpec((HP, in_size), lambda i: (0, 0)),           # w_in   (resident)
            pl.BlockSpec((HP, 1), lambda i: (0, 0)),                 # b_in   (resident)
            pl.BlockSpec((n_stack, HP, HP), lambda i: (0, 0, 0)),    # w_hid  (resident)
            pl.BlockSpec((HP, 1), lambda i: (0, 0)),                 # w_out  (resident)
        ],
        out_specs=pl.BlockSpec((1, block_b), lambda i: (0, i)),
        compiler_params=pltpu.CompilerParams(
            dimension_semantics=("parallel",)),
    )(x_p, w_in, b_in, w_hid, w_out)

    # Back to the PyTorch layout: (B, 1).
    return out[0, :B].reshape(B, 1)


def init_params(key, input_size, hidden_size=20, num_layers=8):
    """nn.Linear-style init (uniform +-1/sqrt(fan_in)), PyTorch (out, in) layout."""
    keys = jax.random.split(key, 2 * (num_layers + 1))

    def linear(kw, kb, fan_in, fan_out):
        bound = 1.0 / (fan_in ** 0.5)
        W = jax.random.uniform(kw, (fan_out, fan_in), jnp.float32, -bound, bound)
        b = jax.random.uniform(kb, (fan_out,), jnp.float32, -bound, bound)
        return W, b

    layers = [linear(keys[0], keys[1], input_size, hidden_size)]
    for l in range(1, num_layers):
        layers.append(linear(keys[2 * l], keys[2 * l + 1], hidden_size, hidden_size))
    layers.append(linear(keys[2 * num_layers], keys[2 * num_layers + 1],
                         hidden_size, 1))
    return layers


def mann2_reference(x, layers):
    """Pure-JAX reference matching the PyTorch forward."""
    h = x
    for W, b in layers[:-1]:
        h = jax.nn.sigmoid(jnp.dot(h, W.T, precision=lax.Precision.HIGHEST) + b)
    Wf, bf = layers[-1]
    return jax.nn.sigmoid(jnp.dot(h, Wf.T, precision=lax.Precision.HIGHEST) + bf)


if __name__ == "__main__":
    key = jax.random.PRNGKey(0)
    k_x, k_p = jax.random.split(key)

    # Small shapes consistent with the module (hidden_size default 20;
    # num_layers kept small for a quick demo run).
    batch, input_size, hidden_size, num_layers = 256, 16, 20, 8
    x = jax.random.normal(k_x, (batch, input_size), jnp.float32)
    layers = init_params(k_p, input_size, hidden_size, num_layers)

    out = mann2_forward(x, layers)
    out = jax.block_until_ready(out)

    assert out.shape == (batch, 1)
    assert bool(jnp.all((out >= 0.0) & (out <= 1.0)))
    ref = mann2_reference(x, layers)
    assert bool(jnp.allclose(out, ref, atol=1e-3, rtol=1e-3)), \
        float(jnp.max(jnp.abs(out - ref)))
    print("KERNEL_OK")
</pallas_src>

<mosaic_0001>
module attributes {stable_mosaic.version = 11 : i64} {
  func.func @mann2_kernel(%arg0: i32, %arg1: memref<128x16xf32, #tpu.memory_space<vmem>>, %arg2: memref<24x16xf32, #tpu.memory_space<vmem>>, %arg3: memref<24x1xf32, #tpu.memory_space<vmem>>, %arg4: memref<7x24x24xf32, #tpu.memory_space<vmem>>, %arg5: memref<24x1xf32, #tpu.memory_space<vmem>>, %arg6: memref<1x128xf32, #tpu.memory_space<vmem>>) attributes {dimension_semantics = [#tpu.dimension_semantics<parallel>], iteration_bounds = array<i64: 2>, scalar_prefetch = 0 : i64, scratch_operands = 0 : i64, tpu.core_type = #tpu.core_type<tc>, window_params = [{transform_indices = @transform_0, window_bounds = array<i64: 128, 16>}, {pipeline_mode = #tpu.pipeline_mode<synchronous>, transform_indices = @transform_1, window_bounds = array<i64: 24, 16>}, {pipeline_mode = #tpu.pipeline_mode<synchronous>, transform_indices = @transform_2, window_bounds = array<i64: 24, 1>}, {pipeline_mode = #tpu.pipeline_mode<synchronous>, transform_indices = @transform_3, window_bounds = array<i64: 7, 24, 24>}, {pipeline_mode = #tpu.pipeline_mode<synchronous>, transform_indices = @transform_4, window_bounds = array<i64: 24, 1>}, {transform_indices = @transform_5, window_bounds = array<i64: 1, 128>}]} {
    %c0 = arith.constant 0 : index
    %c0_0 = arith.constant 0 : index
    %0 = vector.load %arg2[%c0, %c0_0] : memref<24x16xf32, #tpu.memory_space<vmem>>, vector<24x16xf32>
    %c0_1 = arith.constant 0 : index
    %c0_2 = arith.constant 0 : index
    %1 = vector.load %arg1[%c0_1, %c0_2] : memref<128x16xf32, #tpu.memory_space<vmem>>, vector<128x16xf32>
    %cst = arith.constant dense<0.000000e+00> : vector<24x128xf32>
    %2 = tpu.matmul %0, %1, %cst {dimension_numbers = #tpu.dot_dimension_numbers<[1], [1], [0], [0], [0, 0, 1, 0], [], []>} : vector<24x16xf32>, vector<128x16xf32>, vector<24x128xf32> -> vector<24x128xf32>
    %c0_3 = arith.constant 0 : index
    %c0_4 = arith.constant 0 : index
    %3 = vector.load %arg3[%c0_3, %c0_4] : memref<24x1xf32, #tpu.memory_space<vmem>>, vector<24x1xf32>
    %4 = vector.broadcast %3 : vector<24x1xf32> to vector<24x128xf32>
    %5 = arith.addf %2, %4 : vector<24x128xf32>
    %cst_5 = arith.constant 5.000000e-01 : f32
    %6 = vector.broadcast %cst_5 : f32 to vector<24x128xf32>
    %7 = arith.mulf %6, %5 : vector<24x128xf32>
    %8 = math.tanh %7 : vector<24x128xf32>
    %cst_6 = arith.constant 5.000000e-01 : f32
    %9 = vector.broadcast %cst_6 : f32 to vector<24x128xf32>
    %10 = arith.mulf %9, %8 : vector<24x128xf32>
    %cst_7 = arith.constant 5.000000e-01 : f32
    %11 = vector.broadcast %cst_7 : f32 to vector<24x128xf32>
    %12 = arith.addf %10, %11 : vector<24x128xf32>
    %c0_8 = arith.constant 0 : index
    %c0_9 = arith.constant 0 : index
    %c0_10 = arith.constant 0 : index
    %13 = vector.load %arg4[%c0_8, %c0_9, %c0_10] : memref<7x24x24xf32, #tpu.memory_space<vmem>>, vector<1x24x24xf32>
    %14 = vector.shape_cast %13 : vector<1x24x24xf32> to vector<24x24xf32>
    %cst_11 = arith.constant dense<0.000000e+00> : vector<24x128xf32>
    %15 = tpu.matmul %14, %12, %cst_11 {dimension_numbers = #tpu.dot_dimension_numbers<[1], [0], [0], [1], [0, 0, 1, 1], [], []>} : vector<24x24xf32>, vector<24x128xf32>, vector<24x128xf32> -> vector<24x128xf32>
    %cst_12 = arith.constant 5.000000e-01 : f32
    %16 = vector.broadcast %cst_12 : f32 to vector<24x128xf32>
    %17 = arith.mulf %16, %15 : vector<24x128xf32>
    %18 = math.tanh %17 : vector<24x128xf32>
    %cst_13 = arith.constant 5.000000e-01 : f32
    %19 = vector.broadcast %cst_13 : f32 to vector<24x128xf32>
    %20 = arith.mulf %19, %18 : vector<24x128xf32>
    %cst_14 = arith.constant 5.000000e-01 : f32
    %21 = vector.broadcast %cst_14 : f32 to vector<24x128xf32>
    %22 = arith.addf %20, %21 : vector<24x128xf32>
    %c1 = arith.constant 1 : index
    %c0_15 = arith.constant 0 : index
    %c0_16 = arith.constant 0 : index
    %23 = vector.load %arg4[%c1, %c0_15, %c0_16] : memref<7x24x24xf32, #tpu.memory_space<vmem>>, vector<1x24x24xf32>
    %24 = vector.shape_cast %23 : vector<1x24x24xf32> to vector<24x24xf32>
    %cst_17 = arith.constant dense<0.000000e+00> : vector<24x128xf32>
    %25 = tpu.matmul %24, %22, %cst_17 {dimension_numbers = #tpu.dot_dimension_numbers<[1], [0], [0], [1], [0, 0, 1, 1], [], []>} : vector<24x24xf32>, vector<24x128xf32>, vector<24x128xf32> -> vector<24x128xf32>
    %cst_18 = arith.constant 5.000000e-01 : f32
    %26 = vector.broadcast %cst_18 : f32 to vector<24x128xf32>
    %27 = arith.mulf %26, %25 : vector<24x128xf32>
    %28 = math.tanh %27 : vector<24x128xf32>
    %cst_19 = arith.constant 5.000000e-01 : f32
    %29 = vector.broadcast %cst_19 : f32 to vector<24x128xf32>
    %30 = arith.mulf %29, %28 : vector<24x128xf32>
    %cst_20 = arith.constant 5.000000e-01 : f32
    %31 = vector.broadcast %cst_20 : f32 to vector<24x128xf32>
    %32 = arith.addf %30, %31 : vector<24x128xf32>
    %c2 = arith.constant 2 : index
    %c0_21 = arith.constant 0 : index
    %c0_22 = arith.constant 0 : index
    %33 = vector.load %arg4[%c2, %c0_21, %c0_22] : memref<7x24x24xf32, #tpu.memory_space<vmem>>, vector<1x24x24xf32>
    %34 = vector.shape_cast %33 : vector<1x24x24xf32> to vector<24x24xf32>
    %cst_23 = arith.constant dense<0.000000e+00> : vector<24x128xf32>
    %35 = tpu.matmul %34, %32, %cst_23 {dimension_numbers = #tpu.dot_dimension_numbers<[1], [0], [0], [1], [0, 0, 1, 1], [], []>} : vector<24x24xf32>, vector<24x128xf32>, vector<24x128xf32> -> vector<24x128xf32>
    %cst_24 = arith.constant 5.000000e-01 : f32
    %36 = vector.broadcast %cst_24 : f32 to vector<24x128xf32>
    %37 = arith.mulf %36, %35 : vector<24x128xf32>
    %38 = math.tanh %37 : vector<24x128xf32>
    %cst_25 = arith.constant 5.000000e-01 : f32
    %39 = vector.broadcast %cst_25 : f32 to vector<24x128xf32>
    %40 = arith.mulf %39, %38 : vector<24x128xf32>
    %cst_26 = arith.constant 5.000000e-01 : f32
    %41 = vector.broadcast %cst_26 : f32 to vector<24x128xf32>
    %42 = arith.addf %40, %41 : vector<24x128xf32>
    %c3 = arith.constant 3 : index
    %c0_27 = arith.constant 0 : index
    %c0_28 = arith.constant 0 : index
    %43 = vector.load %arg4[%c3, %c0_27, %c0_28] : memref<7x24x24xf32, #tpu.memory_space<vmem>>, vector<1x24x24xf32>
    %44 = vector.shape_cast %43 : vector<1x24x24xf32> to vector<24x24xf32>
    %cst_29 = arith.constant dense<0.000000e+00> : vector<24x128xf32>
    %45 = tpu.matmul %44, %42, %cst_29 {dimension_numbers = #tpu.dot_dimension_numbers<[1], [0], [0], [1], [0, 0, 1, 1], [], []>} : vector<24x24xf32>, vector<24x128xf32>, vector<24x128xf32> -> vector<24x128xf32>
    %cst_30 = arith.constant 5.000000e-01 : f32
    %46 = vector.broadcast %cst_30 : f32 to vector<24x128xf32>
    %47 = arith.mulf %46, %45 : vector<24x128xf32>
    %48 = math.tanh %47 : vector<24x128xf32>
    %cst_31 = arith.constant 5.000000e-01 : f32
    %49 = vector.broadcast %cst_31 : f32 to vector<24x128xf32>
    %50 = arith.mulf %49, %48 : vector<24x128xf32>
    %cst_32 = arith.constant 5.000000e-01 : f32
    %51 = vector.broadcast %cst_32 : f32 to vector<24x128xf32>
    %52 = arith.addf %50, %51 : vector<24x128xf32>
    %c4 = arith.constant 4 : index
    %c0_33 = arith.constant 0 : index
    %c0_34 = arith.constant 0 : index
    %53 = vector.load %arg4[%c4, %c0_33, %c0_34] : memref<7x24x24xf32, #tpu.memory_space<vmem>>, vector<1x24x24xf32>
    %54 = vector.shape_cast %53 : vector<1x24x24xf32> to vector<24x24xf32>
    %cst_35 = arith.constant dense<0.000000e+00> : vector<24x128xf32>
    %55 = tpu.matmul %54, %52, %cst_35 {dimension_numbers = #tpu.dot_dimension_numbers<[1], [0], [0], [1], [0, 0, 1, 1], [], []>} : vector<24x24xf32>, vector<24x128xf32>, vector<24x128xf32> -> vector<24x128xf32>
    %cst_36 = arith.constant 5.000000e-01 : f32
    %56 = vector.broadcast %cst_36 : f32 to vector<24x128xf32>
    %57 = arith.mulf %56, %55 : vector<24x128xf32>
    %58 = math.tanh %57 : vector<24x128xf32>
    %cst_37 = arith.constant 5.000000e-01 : f32
    %59 = vector.broadcast %cst_37 : f32 to vector<24x128xf32>
    %60 = arith.mulf %59, %58 : vector<24x128xf32>
    %cst_38 = arith.constant 5.000000e-01 : f32
    %61 = vector.broadcast %cst_38 : f32 to vector<24x128xf32>
    %62 = arith.addf %60, %61 : vector<24x128xf32>
    %c5 = arith.constant 5 : index
    %c0_39 = arith.constant 0 : index
    %c0_40 = arith.constant 0 : index
    %63 = vector.load %arg4[%c5, %c0_39, %c0_40] : memref<7x24x24xf32, #tpu.memory_space<vmem>>, vector<1x24x24xf32>
    %64 = vector.shape_cast %63 : vector<1x24x24xf32> to vector<24x24xf32>
    %cst_41 = arith.constant dense<0.000000e+00> : vector<24x128xf32>
    %65 = tpu.matmul %64, %62, %cst_41 {dimension_numbers = #tpu.dot_dimension_numbers<[1], [0], [0], [1], [0, 0, 1, 1], [], []>} : vector<24x24xf32>, vector<24x128xf32>, vector<24x128xf32> -> vector<24x128xf32>
    %cst_42 = arith.constant 5.000000e-01 : f32
    %66 = vector.broadcast %cst_42 : f32 to vector<24x128xf32>
    %67 = arith.mulf %66, %65 : vector<24x128xf32>
    %68 = math.tanh %67 : vector<24x128xf32>
    %cst_43 = arith.constant 5.000000e-01 : f32
    %69 = vector.broadcast %cst_43 : f32 to vector<24x128xf32>
    %70 = arith.mulf %69, %68 : vector<24x128xf32>
    %cst_44 = arith.constant 5.000000e-01 : f32
    %71 = vector.broadcast %cst_44 : f32 to vector<24x128xf32>
    %72 = arith.addf %70, %71 : vector<24x128xf32>
    %c6 = arith.constant 6 : index
    %c0_45 = arith.constant 0 : index
    %c0_46 = arith.constant 0 : index
    %73 = vector.load %arg4[%c6, %c0_45, %c0_46] : memref<7x24x24xf32, #tpu.memory_space<vmem>>, vector<1x24x24xf32>
    %74 = vector.shape_cast %73 : vector<1x24x24xf32> to vector<24x24xf32>
    %cst_47 = arith.constant dense<0.000000e+00> : vector<24x128xf32>
    %75 = tpu.matmul %74, %72, %cst_47 {dimension_numbers = #tpu.dot_dimension_numbers<[1], [0], [0], [1], [0, 0, 1, 1], [], []>} : vector<24x24xf32>, vector<24x128xf32>, vector<24x128xf32> -> vector<24x128xf32>
    %cst_48 = arith.constant 5.000000e-01 : f32
    %76 = vector.broadcast %cst_48 : f32 to vector<24x128xf32>
    %77 = arith.mulf %76, %75 : vector<24x128xf32>
    %78 = math.tanh %77 : vector<24x128xf32>
    %cst_49 = arith.constant 5.000000e-01 : f32
    %79 = vector.broadcast %cst_49 : f32 to vector<24x128xf32>
    %80 = arith.mulf %79, %78 : vector<24x128xf32>
    %cst_50 = arith.constant 5.000000e-01 : f32
    %81 = vector.broadcast %cst_50 : f32 to vector<24x128xf32>
    %82 = arith.addf %80, %81 : vector<24x128xf32>
    %c0_51 = arith.constant 0 : index
    %c0_52 = arith.constant 0 : index
    %83 = vector.load %arg5[%c0_51, %c0_52] : memref<24x1xf32, #tpu.memory_space<vmem>>, vector<24x1xf32>
    %84 = vector.broadcast %83 : vector<24x1xf32> to vector<24x128xf32>
    %85 = arith.mulf %84, %82 : vector<24x128xf32>
    %cst_53 = arith.constant dense<0.000000e+00> : vector<128xf32>
    %86 = vector.multi_reduction <add>, %85, %cst_53 [0] : vector<24x128xf32> to vector<128xf32>
    %87 = vector.shape_cast %86 : vector<128xf32> to vector<1x128xf32>
    %cst_54 = arith.constant 5.000000e-01 : f32
    %88 = vector.broadcast %cst_54 : f32 to vector<1x128xf32>
    %89 = arith.mulf %88, %87 : vector<1x128xf32>
    %90 = math.tanh %89 : vector<1x128xf32>
    %cst_55 = arith.constant 5.000000e-01 : f32
    %91 = vector.broadcast %cst_55 : f32 to vector<1x128xf32>
    %92 = arith.mulf %91, %90 : vector<1x128xf32>
    %cst_56 = arith.constant 5.000000e-01 : f32
    %93 = vector.broadcast %cst_56 : f32 to vector<1x128xf32>
    %94 = arith.addf %92, %93 : vector<1x128xf32>
    %c0_57 = arith.constant 0 : index
    %c0_58 = arith.constant 0 : index
    %95 = vector.load %arg6[%c0_57, %c0_58] : memref<1x128xf32, #tpu.memory_space<vmem>>, vector<1x128xf32>
    tpu.vector_store %arg6[%c0_57, %c0_58], %94 {strides = array<i32>} : memref<1x128xf32, #tpu.memory_space<vmem>>, vector<1x128xf32>,
    return
  }
  func.func @transform_0(%arg0: i32) -> (i32, i32) {
    %c0_i32 = arith.constant 0 : i32
    %c0_i32_0 = arith.constant 0 : i32
    return %arg0, %c0_i32 : i32, i32
  }
  func.func @transform_1(%arg0: i32) -> (i32, i32) {
    %c0_i32 = arith.constant 0 : i32
    %c0_i32_0 = arith.constant 0 : i32
    %c0_i32_1 = arith.constant 0 : i32
    return %c0_i32, %c0_i32_0 : i32, i32
  }
  func.func @transform_2(%arg0: i32) -> (i32, i32) {
    %c0_i32 = arith.constant 0 : i32
    %c0_i32_0 = arith.constant 0 : i32
    %c0_i32_1 = arith.constant 0 : i32
    return %c0_i32, %c0_i32_0 : i32, i32
  }
  func.func @transform_3(%arg0: i32) -> (i32, i32, i32) {
    %c0_i32 = arith.constant 0 : i32
    %c0_i32_0 = arith.constant 0 : i32
    %c0_i32_1 = arith.constant 0 : i32
    %c0_i32_2 = arith.constant 0 : i32
    return %c0_i32, %c0_i32_0, %c0_i32_1 : i32, i32, i32
  }
  func.func @transform_4(%arg0: i32) -> (i32, i32) {
    %c0_i32 = arith.constant 0 : i32
    %c0_i32_0 = arith.constant 0 : i32
    %c0_i32_1 = arith.constant 0 : i32
    return %c0_i32, %c0_i32_0 : i32, i32
  }
  func.func @transform_5(%arg0: i32) -> (i32, i32) {
    %c0_i32 = arith.constant 0 : i32
    %c0_i32_0 = arith.constant 0 : i32
    return %c0_i32, %arg0 : i32, i32
  }
}

</mosaic_0001>

<llo_original>
// kernel: tpu_custom_call.1
$region0: #{tpu_custom_call.1}
  #allocation0 [shape = 'u32[]', space=smem, size = 0x4, offset = 0x4, fixed_abs, tag = 'smem constant byte address 0x4 - core index']
  #allocation1 [shape = 'u32[144,128]{1,0:T(1,128)}', space=vmem, size = 0x12000, scoped, tag = 'internal scratch']
  %s0 = inlined_call_operand.vmem [shape: f32[256,16], index: 0, kind: input, shape index: {}]
  %s1 = inlined_call_operand.vmem [shape: f32[24,16], index: 1, kind: input, shape index: {}]
  %s2 = inlined_call_operand.vmem [shape: f32[24,1], index: 2, kind: input, shape index: {}]
  %s3 = inlined_call_operand.vmem [shape: f32[7,24,24], index: 3, kind: input, shape index: {}]
  %s4 = inlined_call_operand.vmem [shape: f32[24,1], index: 4, kind: input, shape index: {}]
  %s5 = inlined_call_operand.hbm [shape: f32[1,256], index: 5, kind: output, shape index: {}]
  %s6 = sld [smem:[#allocation0]]
  $region53: #{tpu_custom_call.1} parent=0
    _
  %s8 = ssub.s32 1, %s6
  %s9 = scalar_select 0, %s8, %s6
  $region1: #{tpu_custom_call.1} parent=0
    #allocation2 [shape = 'u8[1024]{0}', space=vmem, size = 0x400, scoped, tag = 'output window, operand 0']
    #allocation3 [shape = 's32[2]{0}', space=sflag, size = 0x8, scoped, tag = 'scoped memory for tpu_custom_call.1']
    %10 = vsyncpa [#allocation3], 0
    %s11 = scalar_lea.sflag [#allocation3], 1
    %12 = vsyncpa %s11, 0
    loop: start=0, step=1, limit=4
    $region2: #{tpu_custom_call.1} parent=1 // loop_pre_header
      _
    $region3: #{tpu_custom_call.1} parent=1 // loop_header
      %s14 = sphi 0, %s18
      %p15 = scmp.ge.s32.totalorder %s14, 4
      %s24 = sphi 0, %s26
      %s27 = sphi 0, %s24
      %s28 = sphi 0, %s27
      %s44 = sphi 0, %s28
      %s48 = sphi 0, %s48
      %s50 = sphi 0, %s48
      %s51 = sphi 0, %s50
      %s65 = sphi 0, %s51
      %s69 = sphi 0, %s69
      %s71 = sphi 0, %s69
      %s72 = sphi 0, %s71
      %s86 = sphi 0, %s72
      %s90 = sphi 0, %s90
      %s92 = sphi 0, %s90
      %s93 = sphi 0, %s92
      %s107 = sphi 0, %s93
      %s111 = sphi 0, %s111
      %s113 = sphi 0, %s111
      %s114 = sphi 0, %s113
      %s128 = sphi 0, %s114
      %s134 = sphi 0, %s136
      %s137 = sphi 0, %s134
      %s138 = sphi 0, %s137
      %s154 = sphi 0, %s138
    $region4: #{tpu_custom_call.1} parent=1 // loop_header_branch
      %17 = sbr.rel (%p15) target = $region8
    $region5: #{tpu_custom_call.1} parent=1 // loop_body
      %s19 = ssub.s32 %s14, 1
      %s20 = ssub.s32 %s14, 2
      %s21 = sadd.s32 %s14, 1
      %s22 = ssub.s32 %s14, %s21
      %p23 = scmp.eq.s32.totalorder %s22, 0
      %s25 = sadd.s32 %s24, 1
      %s26 = scalar_select %p23, %s24, %s25
      %p29 = pneg %p23
      %p30 = scmp.eq.s32.totalorder %s14, 1
      %p31 = por %p29, %p30
      %p32 = scmp.ne.s32.totalorder %s24, %s27
      %p33 = scmp.eq.s32.totalorder %s14, 0
      %p34 = por %p32, %p33
      %p35 = scmp.ne.s32.totalorder %s24, %s27
      %p36 = scmp.eq.s32.totalorder %s19, 1
      %p37 = por %p35, %p36
      %p38 = scmp.ne.s32.totalorder %s27, %s28
      %p39 = scmp.eq.s32.totalorder %s19, 0
      %p40 = por %p38, %p39
      %p41 = scmp.ne.s32.totalorder %s27, %s28
      %p42 = scmp.eq.s32.totalorder %s20, 1
      %p43 = por %p41, %p42
      %p45 = scmp.ne.s32.totalorder %s28, %s44
      %p46 = scmp.eq.s32.totalorder %s20, 0
      %p47 = por %p45, %p46
      %s49 = sadd.s32 %s48, 1
      %p52 = scmp.eq.s32.totalorder %s14, 1
      %p53 = scmp.ne.s32.totalorder %s48, %s50
      %p54 = scmp.eq.s32.totalorder %s14, 0
      %p55 = por %p53, %p54
      %p56 = scmp.ne.s32.totalorder %s48, %s50
      %p57 = scmp.eq.s32.totalorder %s19, 1
      %p58 = por %p56, %p57
      %p59 = scmp.ne.s32.totalorder %s50, %s51
      %p60 = scmp.eq.s32.totalorder %s19, 0
      %p61 = por %p59, %p60
      %p62 = scmp.ne.s32.totalorder %s50, %s51
      %p63 = scmp.eq.s32.totalorder %s20, 1
      %p64 = por %p62, %p63
      %p66 = scmp.ne.s32.totalorder %s51, %s65
      %p67 = scmp.eq.s32.totalorder %s20, 0
      %p68 = por %p66, %p67
      %s70 = sadd.s32 %s69, 1
      %p73 = scmp.eq.s32.totalorder %s14, 1
      %p74 = scmp.ne.s32.totalorder %s69, %s71
      %p75 = scmp.eq.s32.totalorder %s14, 0
      %p76 = por %p74, %p75
      %p77 = scmp.ne.s32.totalorder %s69, %s71
      %p78 = scmp.eq.s32.totalorder %s19, 1
      %p79 = por %p77, %p78
      %p80 = scmp.ne.s32.totalorder %s71, %s72
      %p81 = scmp.eq.s32.totalorder %s19, 0
      %p82 = por %p80, %p81
      %p83 = scmp.ne.s32.totalorder %s71, %s72
      %p84 = scmp.eq.s32.totalorder %s20, 1
      %p85 = por %p83, %p84
      %p87 = scmp.ne.s32.totalorder %s72, %s86
      %p88 = scmp.eq.s32.totalorder %s20, 0
      %p89 = por %p87, %p88
      %s91 = sadd.s32 %s90, 1
      %p94 = scmp.eq.s32.totalorder %s14, 1
      %p95 = scmp.ne.s32.totalorder %s90, %s92
      %p96 = scmp.eq.s32.totalorder %s14, 0
      %p97 = por %p95, %p96
      %p98 = scmp.ne.s32.totalorder %s90, %s92
      %p99 = scmp.eq.s32.totalorder %s19, 1
      %p100 = por %p98, %p99
      %p101 = scmp.ne.s32.totalorder %s92, %s93
      %p102 = scmp.eq.s32.totalorder %s19, 0
      %p103 = por %p101, %p102
      %p104 = scmp.ne.s32.totalorder %s92, %s93
      %p105 = scmp.eq.s32.totalorder %s20, 1
      %p106 = por %p104, %p105
      %p108 = scmp.ne.s32.totalorder %s93, %s107
      %p109 = scmp.eq.s32.totalorder %s20, 0
      %p110 = por %p108, %p109
      %s112 = sadd.s32 %s111, 1
      %p115 = scmp.eq.s32.totalorder %s14, 1
      %p116 = scmp.ne.s32.totalorder %s111, %s113
      %p117 = scmp.eq.s32.totalorder %s14, 0
      %p118 = por %p116, %p117
      %p119 = scmp.ne.s32.totalorder %s111, %s113
      %p120 = scmp.eq.s32.totalorder %s19, 1
      %p121 = por %p119, %p120
      %p122 = scmp.ne.s32.totalorder %s113, %s114
      %p123 = scmp.eq.s32.totalorder %s19, 0
      %p124 = por %p122, %p123
      %p125 = scmp.ne.s32.totalorder %s113, %s114
      %p126 = scmp.eq.s32.totalorder %s20, 1
      %p127 = por %p125, %p126
      %p129 = scmp.ne.s32.totalorder %s114, %s128
      %p130 = scmp.eq.s32.totalorder %s20, 0
      %p131 = por %p129, %p130
      %s132 = ssub.s32 %s14, %s21
      %p133 = scmp.eq.s32.totalorder %s132, 0
      %s135 = sadd.s32 %s134, 1
      %s136 = scalar_select %p133, %s134, %s135
      %p139 = pneg %p133
      %p140 = scmp.eq.s32.totalorder %s14, 1
      %p141 = por %p139, %p140
      %p142 = scmp.ne.s32.totalorder %s134, %s137
      %p143 = scmp.eq.s32.totalorder %s14, 0
      %p144 = por %p142, %p143
      %p145 = scmp.ne.s32.totalorder %s134, %s137
      %p146 = scmp.eq.s32.totalorder %s19, 1
      %p147 = por %p145, %p146
      %p148 = scmp.ne.s32.totalorder %s137, %s138
      %p149 = scmp.eq.s32.totalorder %s19, 0
      %p150 = por %p148, %p149
      %p151 = scmp.ne.s32.totalorder %s137, %s138
      %p152 = scmp.eq.s32.totalorder %s20, 1
      %p153 = por %p151, %p152
      %p155 = scmp.ne.s32.totalorder %s138, %s154
      %p156 = scmp.eq.s32.totalorder %s20, 0
      %p157 = por %p155, %p156
      %p158 = scmp.le.s32.totalorder 1, %s14
      %p159 = scmp.lt.s32.totalorder %s14, 3
      %p160 = pnand %p158, %p159
      %p161 = pneg %p160
      // Predicated region
      $region9: #{tpu_custom_call.1} parent=5 // pred_check
        _
      $region10: #{tpu_custom_call.1} parent=5 // pred_check_branch
        %163 = sbr.rel (%p160) target = $region12
      $region11: #{tpu_custom_call.1} parent=5 // pred_region
        %s164 = ssub.s32 %s14, 1
        // Predicated region
        $region13: #{tpu_custom_call.1} parent=11 // pred_check
          %p165 = pneg %p61
        $region14: #{tpu_custom_call.1} parent=11 // pred_check_branch
          %167 = sbr.rel (%p165) target = $region16
        $region15: #{tpu_custom_call.1} parent=11 // pred_region
          _
        $region16: #{tpu_custom_call.1} parent=11 // pred_fallthru
          _
        // Predicated region
        $region17: #{tpu_custom_call.1} parent=11 // pred_check
          %p168 = pneg %p82
        $region18: #{tpu_custom_call.1} parent=11 // pred_check_branch
          %170 = sbr.rel (%p168) target = $region20
        $region19: #{tpu_custom_call.1} parent=11 // pred_region
          _
        $region20: #{tpu_custom_call.1} parent=11 // pred_fallthru
          _
        // Predicated region
        $region21: #{tpu_custom_call.1} parent=11 // pred_check
          %p171 = pneg %p103
        $region22: #{tpu_custom_call.1} parent=11 // pred_check_branch
          %173 = sbr.rel (%p171) target = $region24
        $region23: #{tpu_custom_call.1} parent=11 // pred_region
          _
        $region24: #{tpu_custom_call.1} parent=11 // pred_fallthru
          _
        // Predicated region
        $region25: #{tpu_custom_call.1} parent=11 // pred_check
          %p174 = pneg %p124
        $region26: #{tpu_custom_call.1} parent=11 // pred_check_branch
          %176 = sbr.rel (%p174) target = $region28
        $region27: #{tpu_custom_call.1} parent=11 // pred_region
          _
        $region28: #{tpu_custom_call.1} parent=11 // pred_fallthru
          _
      $region12: #{tpu_custom_call.1} parent=5 // pred_fallthru
        _
      %p177 = scmp.lt.s32.totalorder %s14, 2
      // Predicated region
      $region29: #{tpu_custom_call.1} parent=5 // pred_check
        %p178 = pneg %p177
      $region30: #{tpu_custom_call.1} parent=5 // pred_check_branch
        %180 = sbr.rel (%p178) target = $region32
      $region31: #{tpu_custom_call.1} parent=5 // pred_region
        // Predicated region
        $region33: #{tpu_custom_call.1} parent=31 // pred_check
          %p181 = pneg %p34
        $region34: #{tpu_custom_call.1} parent=31 // pred_check_branch
          %183 = sbr.rel (%p181) target = $region36
        $region35: #{tpu_custom_call.1} parent=31 // pred_region
          %s184 = smul.u32 16, %s14
          %p185 = scmp.lt.s32.totalorder %s184, 31
          %s186 = scalar_select %p185, %s184, 31
          %s187 = smul.addr %s186, 8
          %s188 = scalar_lea.vmem %s0, %s187
          %s189 = smul.u32 16, %s14
        $region36: #{tpu_custom_call.1} parent=31 // pred_fallthru
          _
      $region32: #{tpu_custom_call.1} parent=5 // pred_fallthru
        _
      %p190 = scmp.le.s32.totalorder 1, %s14
      %p191 = scmp.lt.s32.totalorder %s14, 3
      %p192 = pnand %p190, %p191
      %p193 = pneg %p192
      // Predicated region
      $region37: #{tpu_custom_call.1} parent=5 // pred_check
        _
      $region38: #{tpu_custom_call.1} parent=5 // pred_check_branch
        %195 = sbr.rel (%p192) target = $region40
      $region39: #{tpu_custom_call.1} parent=5 // pred_region
        %s196 = ssub.s32 %s14, 1
        %s197 = smul.u32 16, %s19
        %p198 = scmp.lt.s32.totalorder %s197, 31
        %s199 = scalar_select %p198, %s197, 31
        %s200 = smul.addr %s199, 8
        %s201 = scalar_lea.vmem %s0, %s200
        %p202 = pneg %p40
        %p203 = pneg %p37
        %p204 = pneg %p61
        %p205 = pneg %p58
        %p206 = pneg %p82
        %p207 = pneg %p79
        %p208 = pneg %p103
        %p209 = pneg %p100
        %p210 = pneg %p124
        %p211 = pneg %p121
        %p212 = pneg %p150
        %p213 = pneg %p147
        %s214 = sand.u32 %s137, 1
        %s215 = scalar_lea.sflag [#allocation3], %s214
        %s216 = sand.u32 %s137, 1
        %s217 = scalar_lea.vmem [#allocation2], %s216
        %s218 = smul.u32 16, %s19
        %p219 = scmp.lt.s32.totalorder %s218, 31
        %s220 = scalar_select %p219, %s218, 31
        %s221 = smul.addr %s220, 8
        %s222 = scalar_lea.vmem %s0, %s221
        %s223 = smul.u32 16, %s19
        %v224 = vld [vmem:[%s1] sm:$0xff]
        %v225 = vld [vmem:[%s1 + $0x8] sm:$0xff]
        %v226 = vld [vmem:[%s1 + $0x10] sm:$0xff]
        %v227 = vld [vmem:[%s222] sm:$0xff]
        %v228 = vld [vmem:[%s222 + $0x8] sm:$0xff]
        %v229 = vld [vmem:[%s222 + $0x10] sm:$0xff]
        %v230 = vld [vmem:[%s222 + $0x18] sm:$0xff]
        %v231 = vld [vmem:[%s222 + $0x20] sm:$0xff]
        %v232 = vld [vmem:[%s222 + $0x28] sm:$0xff]
        %v233 = vld [vmem:[%s222 + $0x30] sm:$0xff]
        %v234 = vld [vmem:[%s222 + $0x38] sm:$0xff]
        %v235 = vld [vmem:[%s222 + $0x40] sm:$0xff]
        %v236 = vld [vmem:[%s222 + $0x48] sm:$0xff]
        %v237 = vld [vmem:[%s222 + $0x50] sm:$0xff]
        %v238 = vld [vmem:[%s222 + $0x58] sm:$0xff]
        %v239 = vld [vmem:[%s222 + $0x60] sm:$0xff]
        %v240 = vld [vmem:[%s222 + $0x68] sm:$0xff]
        %v241 = vld [vmem:[%s222 + $0x70] sm:$0xff]
        %v242 = vld [vmem:[%s222 + $0x78] sm:$0xff]
        %v243 = vld [vmem:[%s2] sm:$0xff]
        %v244 = vld [vmem:[%s2 + $0x8] sm:$0xff]
        %v245 = vld [vmem:[%s2 + $0x10] sm:$0xff]
        %247 = vset.pattern.permute.xlu0 0
        %248 = vperm.xlu0 %247, %v243
        %v249 = vpop.permute.xlu0 %248
        %252 = vset.pattern.permute.xlu0 0
        %253 = vperm.xlu0 %252, %v244
        %v254 = vpop.permute.xlu0 %253
        %257 = vset.pattern.permute.xlu0 0
        %258 = vperm.xlu0 %257, %v245
        %v259 = vpop.permute.xlu0 %258
        %vm261 = vcmask 130048
        %v263 = vsel %vm261, %v224, 0
        %v266 = vsel %vm261, %v225, 0
        %v269 = vsel %vm261, %v226, 0
        %v272 = vsel %vm261, %v227, 0
        %v275 = vsel %vm261, %v228, 0
        %v278 = vsel %vm261, %v229, 0
        %v281 = vsel %vm261, %v230, 0
        %v284 = vsel %vm261, %v231, 0
        %v287 = vsel %vm261, %v232, 0
        %v290 = vsel %vm261, %v233, 0
        %v293 = vsel %vm261, %v234, 0
        %v296 = vsel %vm261, %v235, 0
        %v299 = vsel %vm261, %v236, 0
        %v302 = vsel %vm261, %v237, 0
        %v305 = vsel %vm261, %v238, 0
        %v308 = vsel %vm261, %v239, 0
        %v311 = vsel %vm261, %v240, 0
        %v314 = vsel %vm261, %v241, 0
        %v317 = vsel %vm261, %v242, 0
        %319 = vmatprep.subr.mxu0 0.0
        %320 = vmatpush1.xpose.msra.mxu0 %v317
        %321 = vmatprep.subr.mxu0 0.0
        %322 = vmatpush1.xpose.msra.mxu0 %v314
        %323 = vmatprep.subr.mxu0 0.0
        %324 = vmatpush1.xpose.msra.mxu0 %v311
        %325 = vmatprep.subr.mxu0 0.0
        %326 = vmatpush1.xpose.msra.mxu0 %v308
        %327 = vmatprep.subr.mxu0 0.0
        %328 = vmatpush1.xpose.msra.mxu0 %v305
        %329 = vmatprep.subr.mxu0 0.0
        %330 = vmatpush1.xpose.msra.mxu0 %v302
        %331 = vmatprep.subr.mxu0 0.0
        %332 = vmatpush1.xpose.msra.mxu0 %v299
        %333 = vmatprep.subr.mxu0 0.0
        %334 = vmatpush1.xpose.msra.mxu0 %v296
        %335 = vmatprep.subr.mxu0 0.0
        %336 = vmatpush1.xpose.msra.mxu0 %v293
        %337 = vmatprep.subr.mxu0 0.0
        %338 = vmatpush1.xpose.msra.mxu0 %v290
        %339 = vmatprep.subr.mxu0 0.0
        %340 = vmatpush1.xpose.msra.mxu0 %v287
        %341 = vmatprep.subr.mxu0 0.0
        %342 = vmatpush1.xpose.msra.mxu0 %v284
        %343 = vmatprep.subr.mxu0 0.0
        %344 = vmatpush1.xpose.msra.mxu0 %v281
        %345 = vmatprep.subr.mxu0 0.0
        %346 = vmatpush1.xpose.msra.mxu0 %v278
        %347 = vmatprep.subr.mxu0 0.0
        %348 = vmatpush1.xpose.msra.mxu0 %v275
        %349 = vmatprep.subr.mxu0 0.0
        %350 = vmatpush1.xpose.msra.mxu0 %v272
        %351 = vmatprep.subr.mxu0 0.0
        %352 = vmatpush2.xpose.msra.mxu0 0.0
        %353 = vmatprep.subr.mxu0 0.0
        %354 = vmatpush2.xpose.msra.mxu0 0.0
        %355 = vmatprep.subr.mxu0 0.0
        %356 = vmatpush2.xpose.msra.mxu0 0.0
        %357 = vmatprep.subr.mxu0 0.0
        %358 = vmatpush2.xpose.msra.mxu0 0.0
        %359 = vmatprep.subr.mxu0 0.0
        %360 = vmatpush2.xpose.msra.mxu0 0.0
        %361 = vmatprep.subr.mxu0 0.0
        %362 = vmatpush2.xpose.msra.mxu0 0.0
        %363 = vmatprep.subr.mxu0 0.0
        %364 = vmatpush2.xpose.msra.mxu0 0.0
        %365 = vmatprep.subr.mxu0 0.0
        %366 = vmatpush2.xpose.msra.mxu0 0.0
        %367 = vmatprep.subr.mxu0 0.0
        %368 = vmatpush2.xpose.msra.mxu0 0.0
        %369 = vmatprep.subr.mxu0 0.0
        %370 = vmatpush2.xpose.msra.mxu0 0.0
        %371 = vmatprep.subr.mxu0 0.0
        %372 = vmatpush2.xpose.msra.mxu0 0.0
        %373 = vmatprep.subr.mxu0 0.0
        %374 = vmatpush2.xpose.msra.mxu0 0.0
        %375 = vmatprep.subr.mxu0 0.0
        %376 = vmatpush2.xpose.msra.mxu0 0.0
        %377 = vmatprep.subr.mxu0 0.0
        %378 = vmatpush2.xpose.msra.mxu0 0.0
        %379 = vmatprep.subr.mxu0 0.0
        %380 = vmatpush2.xpose.msra.mxu0 0.0
        %381 = vmatprep.subr.mxu0 0.0
        %382 = vmatpush2.xpose.msra.mxu0 0.0
        %383 = vmatprep.mubr.f32.mxu0 0.0
        %384 = vmatmul.mubr.f32.gmra.mxu0 %v263
        %v385 = vpop.f32.mrf.mxu0
        %v386 = vadd.f32 %v249, %v385
        %v387 = vpop.f32.mrf.mxu0
        %388 = vmatprep.mubr.f32.mxu0 0.0
        %389 = vmatmul.mubr.f32.gmra.mxu0 %v266
        %v390 = vpop.f32.mrf.mxu0
        %v391 = vadd.f32 %v254, %v390
        %v392 = vpop.f32.mrf.mxu0
        %393 = vmatprep.mubr.f32.mxu0 0.0
        %394 = vmatmul.mubr.f32.gmra.mxu0 %v269
        %v395 = vpop.f32.mrf.mxu0
        %v396 = vadd.f32 %v259, %v395
        %v397 = vpop.f32.mrf.mxu0
        %398 = vdwg.mxu0
        %v399 = vmul.f32 %v386, 0.5
        %v400 = vmul.f32 %v391, 0.5
        %v401 = vmul.f32 %v396, 0.5
        %v402 = vtanh.pop %v399
        %v403 = vtanh.pop %v400
        %v404 = vtanh.pop %v401
        %v405 = vmul.f32 %v402, 0.5
        %v406 = vmul.f32 %v403, 0.5
        %v407 = vmul.f32 %v404, 0.5
        %v408 = vadd.f32 %v405, 0.5
        %v409 = vadd.f32 %v406, 0.5
        %v410 = vadd.f32 %v407, 0.5
        %v411 = vld [vmem:[%s3] sm:$0xff]
        %v412 = vld [vmem:[%s3 + $0x8] sm:$0xff]
        %v413 = vld [vmem:[%s3 + $0x10] sm:$0xff]
        %vm414 = vcmask 195584
        %v416 = vsel %vm414, %v411, 0
        %v419 = vsel %vm414, %v412, 0
        %v422 = vsel %vm414, %v413, 0
        %424 = vmatprep.subr.mxu0 0.0
        %425 = vmatpush1.msra.mxu0 0.0
        %426 = vmatprep.subr.mxu0 0.0
        %427 = vmatpush1.msra.mxu0 0.0
        %428 = vmatprep.subr.mxu0 0.0
        %429 = vmatpush1.msra.mxu0 0.0
        %430 = vmatprep.subr.mxu0 0.0
        %431 = vmatpush1.msra.mxu0 0.0
        %432 = vmatprep.subr.mxu0 0.0
        %433 = vmatpush1.msra.mxu0 0.0
        %434 = vmatprep.subr.mxu0 0.0
        %435 = vmatpush1.msra.mxu0 0.0
        %436 = vmatprep.subr.mxu0 0.0
        %437 = vmatpush1.msra.mxu0 0.0
        %438 = vmatprep.subr.mxu0 0.0
        %439 = vmatpush1.msra.mxu0 0.0
        %440 = vmatprep.subr.mxu0 0.0
        %441 = vmatpush1.msra.mxu0 0.0
        %442 = vmatprep.subr.mxu0 0.0
        %443 = vmatpush1.msra.mxu0 0.0
        %444 = vmatprep.subr.mxu0 0.0
        %445 = vmatpush1.msra.mxu0 0.0
        %446 = vmatprep.subr.mxu0 0.0
        %447 = vmatpush1.msra.mxu0 0.0
        %448 = vmatprep.subr.mxu0 0.0
        %449 = vmatpush1.msra.mxu0 0.0
        %450 = vmatprep.subr.mxu0 0.0
        %451 = vmatpush1.msra.mxu0 %v410
        %452 = vmatprep.subr.mxu0 0.0
        %453 = vmatpush1.msra.mxu0 %v409
        %454 = vmatprep.subr.mxu0 0.0
        %455 = vmatpush1.msra.mxu0 %v408
        %456 = vmatprep.subr.mxu0 0.0
        %457 = vmatpush2.msra.mxu0 0.0
        %458 = vmatprep.subr.mxu0 0.0
        %459 = vmatpush2.msra.mxu0 0.0
        %460 = vmatprep.subr.mxu0 0.0
        %461 = vmatpush2.msra.mxu0 0.0
        %462 = vmatprep.subr.mxu0 0.0
        %463 = vmatpush2.msra.mxu0 0.0
        %464 = vmatprep.subr.mxu0 0.0
        %465 = vmatpush2.msra.mxu0 0.0
        %466 = vmatprep.subr.mxu0 0.0
        %467 = vmatpush2.msra.mxu0 0.0
        %468 = vmatprep.subr.mxu0 0.0
        %469 = vmatpush2.msra.mxu0 0.0
        %470 = vmatprep.subr.mxu0 0.0
        %471 = vmatpush2.msra.mxu0 0.0
        %472 = vmatprep.subr.mxu0 0.0
        %473 = vmatpush2.msra.mxu0 0.0
        %474 = vmatprep.subr.mxu0 0.0
        %475 = vmatpush2.msra.mxu0 0.0
        %476 = vmatprep.subr.mxu0 0.0
        %477 = vmatpush2.msra.mxu0 0.0
        %478 = vmatprep.subr.mxu0 0.0
        %479 = vmatpush2.msra.mxu0 0.0
        %480 = vmatprep.subr.mxu0 0.0
        %481 = vmatpush2.msra.mxu0 0.0
        %482 = vmatprep.subr.mxu0 0.0
        %483 = vmatpush2.msra.mxu0 0.0
        %484 = vmatprep.subr.mxu0 0.0
        %485 = vmatpush2.msra.mxu0 0.0
        %486 = vmatprep.subr.mxu0 0.0
        %487 = vmatpush2.msra.mxu0 0.0
        %488 = vmatprep.mubr.f32.mxu0 0.0
        %489 = vmatmul.mubr.f32.gmra.mxu0 %v416
        %v490 = vpop.f32.mrf.mxu0
        %v491 = vadd.f32 0.0, %v490
        %v492 = vpop.f32.mrf.mxu0
        %493 = vmatprep.mubr.f32.mxu0 0.0
        %494 = vmatmul.mubr.f32.gmra.mxu0 %v419
        %v495 = vpop.f32.mrf.mxu0
        %v496 = vadd.f32 0.0, %v495
        %v497 = vpop.f32.mrf.mxu0
        %498 = vmatprep.mubr.f32.mxu0 0.0
        %499 = vmatmul.mubr.f32.gmra.mxu0 %v422
        %v500 = vpop.f32.mrf.mxu0
        %v501 = vadd.f32 0.0, %v500
        %v502 = vpop.f32.mrf.mxu0
        %503 = vdwg.mxu0
        %v504 = vmul.f32 %v491, 0.5
        %v505 = vmul.f32 %v496, 0.5
        %v506 = vmul.f32 %v501, 0.5
        %v507 = vtanh.pop %v504
        %v508 = vtanh.pop %v505
        %v509 = vtanh.pop %v506
        %v510 = vmul.f32 %v507, 0.5
        %v511 = vmul.f32 %v508, 0.5
        %v512 = vmul.f32 %v509, 0.5
        %v513 = vadd.f32 %v510, 0.5
        %v514 = vadd.f32 %v511, 0.5
        %v515 = vadd.f32 %v512, 0.5
        %s516 = scalar_lea.vmem %s3, 24
        %v517 = vld [vmem:[%s516] sm:$0xff]
        %v518 = vld [vmem:[%s516 + $0x8] sm:$0xff]
        %v519 = vld [vmem:[%s516 + $0x10] sm:$0xff]
        %v521 = vsel %vm414, %v517, 0
        %v524 = vsel %vm414, %v518, 0
        %v527 = vsel %vm414, %v519, 0
        %529 = vmatprep.subr.mxu0 0.0
        %530 = vmatpush1.msra.mxu0 0.0
        %531 = vmatprep.subr.mxu0 0.0
        %532 = vmatpush1.msra.mxu0 0.0
        %533 = vmatprep.subr.mxu0 0.0
        %534 = vmatpush1.msra.mxu0 0.0
        %535 = vmatprep.subr.mxu0 0.0
        %536 = vmatpush1.msra.mxu0 0.0
        %537 = vmatprep.subr.mxu0 0.0
        %538 = vmatpush1.msra.mxu0 0.0
        %539 = vmatprep.subr.mxu0 0.0
        %540 = vmatpush1.msra.mxu0 0.0
        %541 = vmatprep.subr.mxu0 0.0
        %542 = vmatpush1.msra.mxu0 0.0
        %543 = vmatprep.subr.mxu0 0.0
        %544 = vmatpush1.msra.mxu0 0.0
        %545 = vmatprep.subr.mxu0 0.0
        %546 = vmatpush1.msra.mxu0 0.0
        %547 = vmatprep.subr.mxu0 0.0
        %548 = vmatpush1.msra.mxu0 0.0
        %549 = vmatprep.subr.mxu0 0.0
        %550 = vmatpush1.msra.mxu0 0.0
        %551 = vmatprep.subr.mxu0 0.0
        %552 = vmatpush1.msra.mxu0 0.0
        %553 = vmatprep.subr.mxu0 0.0
        %554 = vmatpush1.msra.mxu0 0.0
        %555 = vmatprep.subr.mxu0 0.0
        %556 = vmatpush1.msra.mxu0 %v515
        %557 = vmatprep.subr.mxu0 0.0
        %558 = vmatpush1.msra.mxu0 %v514
        %559 = vmatprep.subr.mxu0 0.0
        %560 = vmatpush1.msra.mxu0 %v513
        %561 = vmatprep.subr.mxu0 0.0
        %562 = vmatpush2.msra.mxu0 0.0
        %563 = vmatprep.subr.mxu0 0.0
        %564 = vmatpush2.msra.mxu0 0.0
        %565 = vmatprep.subr.mxu0 0.0
        %566 = vmatpush2.msra.mxu0 0.0
        %567 = vmatprep.subr.mxu0 0.0
        %568 = vmatpush2.msra.mxu0 0.0
        %569 = vmatprep.subr.mxu0 0.0
        %570 = vmatpush2.msra.mxu0 0.0
        %571 = vmatprep.subr.mxu0 0.0
        %572 = vmatpush2.msra.mxu0 0.0
        %573 = vmatprep.subr.mxu0 0.0
        %574 = vmatpush2.msra.mxu0 0.0
        %575 = vmatprep.subr.mxu0 0.0
        %576 = vmatpush2.msra.mxu0 0.0
        %577 = vmatprep.subr.mxu0 0.0
        %578 = vmatpush2.msra.mxu0 0.0
        %579 = vmatprep.subr.mxu0 0.0
        %580 = vmatpush2.msra.mxu0 0.0
        %581 = vmatprep.subr.mxu0 0.0
        %582 = vmatpush2.msra.mxu0 0.0
        %583 = vmatprep.subr.mxu0 0.0
        %584 = vmatpush2.msra.mxu0 0.0
        %585 = vmatprep.subr.mxu0 0.0
        %586 = vmatpush2.msra.mxu0 0.0
        %587 = vmatprep.subr.mxu0 0.0
        %588 = vmatpush2.msra.mxu0 0.0
        %589 = vmatprep.subr.mxu0 0.0
        %590 = vmatpush2.msra.mxu0 0.0
        %591 = vmatprep.subr.mxu0 0.0
        %592 = vmatpush2.msra.mxu0 0.0
        %593 = vmatprep.mubr.f32.mxu0 0.0
        %594 = vmatmul.mubr.f32.gmra.mxu0 %v521
        %v595 = vpop.f32.mrf.mxu0
        %v596 = vadd.f32 0.0, %v595
        %v597 = vpop.f32.mrf.mxu0
        %598 = vmatprep.mubr.f32.mxu0 0.0
        %599 = vmatmul.mubr.f32.gmra.mxu0 %v524
        %v600 = vpop.f32.mrf.mxu0
        %v601 = vadd.f32 0.0, %v600
        %v602 = vpop.f32.mrf.mxu0
        %603 = vmatprep.mubr.f32.mxu0 0.0
        %604 = vmatmul.mubr.f32.gmra.mxu0 %v527
        %v605 = vpop.f32.mrf.mxu0
        %v606 = vadd.f32 0.0, %v605
        %v607 = vpop.f32.mrf.mxu0
        %608 = vdwg.mxu0
        %v609 = vmul.f32 %v596, 0.5
        %v610 = vmul.f32 %v601, 0.5
        %v611 = vmul.f32 %v606, 0.5
        %v612 = vtanh.pop %v609
        %v613 = vtanh.pop %v610
        %v614 = vtanh.pop %v611
        %v615 = vmul.f32 %v612, 0.5
        %v616 = vmul.f32 %v613, 0.5
        %v617 = vmul.f32 %v614, 0.5
        %v618 = vadd.f32 %v615, 0.5
        %v619 = vadd.f32 %v616, 0.5
        %v620 = vadd.f32 %v617, 0.5
        %s621 = scalar_lea.vmem %s3, 48
        %v622 = vld [vmem:[%s621] sm:$0xff]
        %v623 = vld [vmem:[%s621 + $0x8] sm:$0xff]
        %v624 = vld [vmem:[%s621 + $0x10] sm:$0xff]
        %v626 = vsel %vm414, %v622, 0
        %v629 = vsel %vm414, %v623, 0
        %v632 = vsel %vm414, %v624, 0
        %634 = vmatprep.subr.mxu0 0.0
        %635 = vmatpush1.msra.mxu0 0.0
        %636 = vmatprep.subr.mxu0 0.0
        %637 = vmatpush1.msra.mxu0 0.0
        %638 = vmatprep.subr.mxu0 0.0
        %639 = vmatpush1.msra.mxu0 0.0
        %640 = vmatprep.subr.mxu0 0.0
        %641 = vmatpush1.msra.mxu0 0.0
        %642 = vmatprep.subr.mxu0 0.0
        %643 = vmatpush1.msra.mxu0 0.0
        %644 = vmatprep.subr.mxu0 0.0
        %645 = vmatpush1.msra.mxu0 0.0
        %646 = vmatprep.subr.mxu0 0.0
        %647 = vmatpush1.msra.mxu0 0.0
        %648 = vmatprep.subr.mxu0 0.0
        %649 = vmatpush1.msra.mxu0 0.0
        %650 = vmatprep.subr.mxu0 0.0
        %651 = vmatpush1.msra.mxu0 0.0
        %652 = vmatprep.subr.mxu0 0.0
        %653 = vmatpush1.msra.mxu0 0.0
        %654 = vmatprep.subr.mxu0 0.0
        %655 = vmatpush1.msra.mxu0 0.0
        %656 = vmatprep.subr.mxu0 0.0
        %657 = vmatpush1.msra.mxu0 0.0
        %658 = vmatprep.subr.mxu0 0.0
        %659 = vmatpush1.msra.mxu0 0.0
        %660 = vmatprep.subr.mxu0 0.0
        %661 = vmatpush1.msra.mxu0 %v620
        %662 = vmatprep.subr.mxu0 0.0
        %663 = vmatpush1.msra.mxu0 %v619
        %664 = vmatprep.subr.mxu0 0.0
        %665 = vmatpush1.msra.mxu0 %v618
        %666 = vmatprep.subr.mxu0 0.0
        %667 = vmatpush2.msra.mxu0 0.0
        %668 = vmatprep.subr.mxu0 0.0
        %669 = vmatpush2.msra.mxu0 0.0
        %670 = vmatprep.subr.mxu0 0.0
        %671 = vmatpush2.msra.mxu0 0.0
        %672 = vmatprep.subr.mxu0 0.0
        %673 = vmatpush2.msra.mxu0 0.0
        %674 = vmatprep.subr.mxu0 0.0
        %675 = vmatpush2.msra.mxu0 0.0
        %676 = vmatprep.subr.mxu0 0.0
        %677 = vmatpush2.msra.mxu0 0.0
        %678 = vmatprep.subr.mxu0 0.0
        %679 = vmatpush2.msra.mxu0 0.0
        %680 = vmatprep.subr.mxu0 0.0
        %681 = vmatpush2.msra.mxu0 0.0
        %682 = vmatprep.subr.mxu0 0.0
        %683 = vmatpush2.msra.mxu0 0.0
        %684 = vmatprep.subr.mxu0 0.0
        %685 = vmatpush2.msra.mxu0 0.0
        %686 = vmatprep.subr.mxu0 0.0
        %687 = vmatpush2.msra.mxu0 0.0
        %688 = vmatprep.subr.mxu0 0.0
        %689 = vmatpush2.msra.mxu0 0.0
        %690 = vmatprep.subr.mxu0 0.0
        %691 = vmatpush2.msra.mxu0 0.0
        %692 = vmatprep.subr.mxu0 0.0
        %693 = vmatpush2.msra.mxu0 0.0
        %694 = vmatprep.subr.mxu0 0.0
        %695 = vmatpush2.msra.mxu0 0.0
        %696 = vmatprep.subr.mxu0 0.0
        %697 = vmatpush2.msra.mxu0 0.0
        %698 = vmatprep.mubr.f32.mxu0 0.0
        %699 = vmatmul.mubr.f32.gmra.mxu0 %v626
        %v700 = vpop.f32.mrf.mxu0
        %v701 = vadd.f32 0.0, %v700
        %v702 = vpop.f32.mrf.mxu0
        %703 = vmatprep.mubr.f32.mxu0 0.0
        %704 = vmatmul.mubr.f32.gmra.mxu0 %v629
        %v705 = vpop.f32.mrf.mxu0
        %v706 = vadd.f32 0.0, %v705
        %v707 = vpop.f32.mrf.mxu0
        %708 = vmatprep.mubr.f32.mxu0 0.0
        %709 = vmatmul.mubr.f32.gmra.mxu0 %v632
        %v710 = vpop.f32.mrf.mxu0
        %v711 = vadd.f32 0.0, %v710
        %v712 = vpop.f32.mrf.mxu0
        %713 = vdwg.mxu0
        %v714 = vmul.f32 %v701, 0.5
        %v715 = vmul.f32 %v706, 0.5
        %v716 = vmul.f32 %v711, 0.5
        %v717 = vtanh.pop %v714
        %v718 = vtanh.pop %v715
        %v719 = vtanh.pop %v716
        %v720 = vmul.f32 %v717, 0.5
        %v721 = vmul.f32 %v718, 0.5
        %v722 = vmul.f32 %v719, 0.5
        %v723 = vadd.f32 %v720, 0.5
        %v724 = vadd.f32 %v721, 0.5
        %v725 = vadd.f32 %v722, 0.5
        %s726 = scalar_lea.vmem %s3, 72
        %v727 = vld [vmem:[%s726] sm:$0xff]
        %v728 = vld [vmem:[%s726 + $0x8] sm:$0xff]
        %v729 = vld [vmem:[%s726 + $0x10] sm:$0xff]
        %v731 = vsel %vm414, %v727, 0
        %v734 = vsel %vm414, %v728, 0
        %v737 = vsel %vm414, %v729, 0
        %739 = vmatprep.subr.mxu0 0.0
        %740 = vmatpush1.msra.mxu0 0.0
        %741 = vmatprep.subr.mxu0 0.0
        %742 = vmatpush1.msra.mxu0 0.0
        %743 = vmatprep.subr.mxu0 0.0
        %744 = vmatpush1.msra.mxu0 0.0
        %745 = vmatprep.subr.mxu0 0.0
        %746 = vmatpush1.msra.mxu0 0.0
        %747 = vmatprep.subr.mxu0 0.0
        %748 = vmatpush1.msra.mxu0 0.0
        %749 = vmatprep.subr.mxu0 0.0
        %750 = vmatpush1.msra.mxu0 0.0
        %751 = vmatprep.subr.mxu0 0.0
        %752 = vmatpush1.msra.mxu0 0.0
        %753 = vmatprep.subr.mxu0 0.0
        %754 = vmatpush1.msra.mxu0 0.0
        %755 = vmatprep.subr.mxu0 0.0
        %756 = vmatpush1.msra.mxu0 0.0
        %757 = vmatprep.subr.mxu0 0.0
        %758 = vmatpush1.msra.mxu0 0.0
        %759 = vmatprep.subr.mxu0 0.0
        %760 = vmatpush1.msra.mxu0 0.0
        %761 = vmatprep.subr.mxu0 0.0
        %762 = vmatpush1.msra.mxu0 0.0
        %763 = vmatprep.subr.mxu0 0.0
        %764 = vmatpush1.msra.mxu0 0.0
        %765 = vmatprep.subr.mxu0 0.0
        %766 = vmatpush1.msra.mxu0 %v725
        %767 = vmatprep.subr.mxu0 0.0
        %768 = vmatpush1.msra.mxu0 %v724
        %769 = vmatprep.subr.mxu0 0.0
        %770 = vmatpush1.msra.mxu0 %v723
        %771 = vmatprep.subr.mxu0 0.0
        %772 = vmatpush2.msra.mxu0 0.0
        %773 = vmatprep.subr.mxu0 0.0
        %774 = vmatpush2.msra.mxu0 0.0
        %775 = vmatprep.subr.mxu0 0.0
        %776 = vmatpush2.msra.mxu0 0.0
        %777 = vmatprep.subr.mxu0 0.0
        %778 = vmatpush2.msra.mxu0 0.0
        %779 = vmatprep.subr.mxu0 0.0
        %780 = vmatpush2.msra.mxu0 0.0
        %781 = vmatprep.subr.mxu0 0.0
        %782 = vmatpush2.msra.mxu0 0.0
        %783 = vmatprep.subr.mxu0 0.0
        %784 = vmatpush2.msra.mxu0 0.0
        %785 = vmatprep.subr.mxu0 0.0
        %786 = vmatpush2.msra.mxu0 0.0
        %787 = vmatprep.subr.mxu0 0.0
        %788 = vmatpush2.msra.mxu0 0.0
        %789 = vmatprep.subr.mxu0 0.0
        %790 = vmatpush2.msra.mxu0 0.0
        %791 = vmatprep.subr.mxu0 0.0
        %792 = vmatpush2.msra.mxu0 0.0
        %793 = vmatprep.subr.mxu0 0.0
        %794 = vmatpush2.msra.mxu0 0.0
        %795 = vmatprep.subr.mxu0 0.0
        %796 = vmatpush2.msra.mxu0 0.0
        %797 = vmatprep.subr.mxu0 0.0
        %798 = vmatpush2.msra.mxu0 0.0
        %799 = vmatprep.subr.mxu0 0.0
        %800 = vmatpush2.msra.mxu0 0.0
        %801 = vmatprep.subr.mxu0 0.0
        %802 = vmatpush2.msra.mxu0 0.0
        %803 = vmatprep.mubr.f32.mxu0 0.0
        %804 = vmatmul.mubr.f32.gmra.mxu0 %v731
        %v805 = vpop.f32.mrf.mxu0
        %v806 = vadd.f32 0.0, %v805
        %v807 = vpop.f32.mrf.mxu0
        %808 = vmatprep.mubr.f32.mxu0 0.0
        %809 = vmatmul.mubr.f32.gmra.mxu0 %v734
        %v810 = vpop.f32.mrf.mxu0
        %v811 = vadd.f32 0.0, %v810
        %v812 = vpop.f32.mrf.mxu0
        %813 = vmatprep.mubr.f32.mxu0 0.0
        %814 = vmatmul.mubr.f32.gmra.mxu0 %v737
        %v815 = vpop.f32.mrf.mxu0
        %v816 = vadd.f32 0.0, %v815
        %v817 = vpop.f32.mrf.mxu0
        %818 = vdwg.mxu0
        %v819 = vmul.f32 %v806, 0.5
        %v820 = vmul.f32 %v811, 0.5
        %v821 = vmul.f32 %v816, 0.5
        %v822 = vtanh.pop %v819
        %v823 = vtanh.pop %v820
        %v824 = vtanh.pop %v821
        %v825 = vmul.f32 %v822, 0.5
        %v826 = vmul.f32 %v823, 0.5
        %v827 = vmul.f32 %v824, 0.5
        %v828 = vadd.f32 %v825, 0.5
        %v829 = vadd.f32 %v826, 0.5
        %v830 = vadd.f32 %v827, 0.5
        %s831 = scalar_lea.vmem %s3, 96
        %v832 = vld [vmem:[%s831] sm:$0xff]
        %v833 = vld [vmem:[%s831 + $0x8] sm:$0xff]
        %v834 = vld [vmem:[%s831 + $0x10] sm:$0xff]
        %v836 = vsel %vm414, %v832, 0
        %v839 = vsel %vm414, %v833, 0
        %v842 = vsel %vm414, %v834, 0
        %844 = vmatprep.subr.mxu0 0.0
        %845 = vmatpush1.msra.mxu0 0.0
        %846 = vmatprep.subr.mxu0 0.0
        %847 = vmatpush1.msra.mxu0 0.0
        %848 = vmatprep.subr.mxu0 0.0
        %849 = vmatpush1.msra.mxu0 0.0
        %850 = vmatprep.subr.mxu0 0.0
        %851 = vmatpush1.msra.mxu0 0.0
        %852 = vmatprep.subr.mxu0 0.0
        %853 = vmatpush1.msra.mxu0 0.0
        %854 = vmatprep.subr.mxu0 0.0
        %855 = vmatpush1.msra.mxu0 0.0
        %856 = vmatprep.subr.mxu0 0.0
        %857 = vmatpush1.msra.mxu0 0.0
        %858 = vmatprep.subr.mxu0 0.0
        %859 = vmatpush1.msra.mxu0 0.0
        %860 = vmatprep.subr.mxu0 0.0
        %861 = vmatpush1.msra.mxu0 0.0
        %862 = vmatprep.subr.mxu0 0.0
        %863 = vmatpush1.msra.mxu0 0.0
        %864 = vmatprep.subr.mxu0 0.0
        %865 = vmatpush1.msra.mxu0 0.0
        %866 = vmatprep.subr.mxu0 0.0
        %867 = vmatpush1.msra.mxu0 0.0
        %868 = vmatprep.subr.mxu0 0.0
        %869 = vmatpush1.msra.mxu0 0.0
        %870 = vmatprep.subr.mxu0 0.0
        %871 = vmatpush1.msra.mxu0 %v830
        %872 = vmatprep.subr.mxu0 0.0
        %873 = vmatpush1.msra.mxu0 %v829
        %874 = vmatprep.subr.mxu0 0.0
        %875 = vmatpush1.msra.mxu0 %v828
        %876 = vmatprep.subr.mxu0 0.0
        %877 = vmatpush2.msra.mxu0 0.0
        %878 = vmatprep.subr.mxu0 0.0
        %879 = vmatpush2.msra.mxu0 0.0
        %880 = vmatprep.subr.mxu0 0.0
        %881 = vmatpush2.msra.mxu0 0.0
        %882 = vmatprep.subr.mxu0 0.0
        %883 = vmatpush2.msra.mxu0 0.0
        %884 = vmatprep.subr.mxu0 0.0
        %885 = vmatpush2.msra.mxu0 0.0
        %886 = vmatprep.subr.mxu0 0.0
        %887 = vmatpush2.msra.mxu0 0.0
        %888 = vmatprep.subr.mxu0 0.0
        %889 = vmatpush2.msra.mxu0 0.0
        %890 = vmatprep.subr.mxu0 0.0
        %891 = vmatpush2.msra.mxu0 0.0
        %892 = vmatprep.subr.mxu0 0.0
        %893 = vmatpush2.msra.mxu0 0.0
        %894 = vmatprep.subr.mxu0 0.0
        %895 = vmatpush2.msra.mxu0 0.0
        %896 = vmatprep.subr.mxu0 0.0
        %897 = vmatpush2.msra.mxu0 0.0
        %898 = vmatprep.subr.mxu0 0.0
        %899 = vmatpush2.msra.mxu0 0.0
        %900 = vmatprep.subr.mxu0 0.0
        %901 = vmatpush2.msra.mxu0 0.0
        %902 = vmatprep.subr.mxu0 0.0
        %903 = vmatpush2.msra.mxu0 0.0
        %904 = vmatprep.subr.mxu0 0.0
        %905 = vmatpush2.msra.mxu0 0.0
        %906 = vmatprep.subr.mxu0 0.0
        %907 = vmatpush2.msra.mxu0 0.0
        %908 = vmatprep.mubr.f32.mxu0 0.0
        %909 = vmatmul.mubr.f32.gmra.mxu0 %v836
        %v910 = vpop.f32.mrf.mxu0
        %v911 = vadd.f32 0.0, %v910
        %v912 = vpop.f32.mrf.mxu0
        %913 = vmatprep.mubr.f32.mxu0 0.0
        %914 = vmatmul.mubr.f32.gmra.mxu0 %v839
        %v915 = vpop.f32.mrf.mxu0
        %v916 = vadd.f32 0.0, %v915
        %v917 = vpop.f32.mrf.mxu0
        %918 = vmatprep.mubr.f32.mxu0 0.0
        %919 = vmatmul.mubr.f32.gmra.mxu0 %v842
        %v920 = vpop.f32.mrf.mxu0
        %v921 = vadd.f32 0.0, %v920
        %v922 = vpop.f32.mrf.mxu0
        %923 = vdwg.mxu0
        %v924 = vmul.f32 %v911, 0.5
        %v925 = vmul.f32 %v916, 0.5
        %v926 = vmul.f32 %v921, 0.5
        %v927 = vtanh.pop %v924
        %v928 = vtanh.pop %v925
        %v929 = vtanh.pop %v926
        %v930 = vmul.f32 %v927, 0.5
        %v931 = vmul.f32 %v928, 0.5
        %v932 = vmul.f32 %v929, 0.5
        %v933 = vadd.f32 %v930, 0.5
        %v934 = vadd.f32 %v931, 0.5
        %v935 = vadd.f32 %v932, 0.5
        %s936 = scalar_lea.vmem %s3, 120
        %v937 = vld [vmem:[%s936] sm:$0xff]
        %v938 = vld [vmem:[%s936 + $0x8] sm:$0xff]
        %v939 = vld [vmem:[%s936 + $0x10] sm:$0xff]
        %v941 = vsel %vm414, %v937, 0
        %v944 = vsel %vm414, %v938, 0
        %v947 = vsel %vm414, %v939, 0
        %949 = vmatprep.subr.mxu0 0.0
        %950 = vmatpush1.msra.mxu0 0.0
        %951 = vmatprep.subr.mxu0 0.0
        %952 = vmatpush1.msra.mxu0 0.0
        %953 = vmatprep.subr.mxu0 0.0
        %954 = vmatpush1.msra.mxu0 0.0
        %955 = vmatprep.subr.mxu0 0.0
        %956 = vmatpush1.msra.mxu0 0.0
        %957 = vmatprep.subr.mxu0 0.0
        %958 = vmatpush1.msra.mxu0 0.0
        %959 = vmatprep.subr.mxu0 0.0
        %960 = vmatpush1.msra.mxu0 0.0
        %961 = vmatprep.subr.mxu0 0.0
        %962 = vmatpush1.msra.mxu0 0.0
        %963 = vmatprep.subr.mxu0 0.0
        %964 = vmatpush1.msra.mxu0 0.0
        %965 = vmatprep.subr.mxu0 0.0
        %966 = vmatpush1.msra.mxu0 0.0
        %967 = vmatprep.subr.mxu0 0.0
        %968 = vmatpush1.msra.mxu0 0.0
        %969 = vmatprep.subr.mxu0 0.0
        %970 = vmatpush1.msra.mxu0 0.0
        %971 = vmatprep.subr.mxu0 0.0
        %972 = vmatpush1.msra.mxu0 0.0
        %973 = vmatprep.subr.mxu0 0.0
        %974 = vmatpush1.msra.mxu0 0.0
        %975 = vmatprep.subr.mxu0 0.0
        %976 = vmatpush1.msra.mxu0 %v935
        %977 = vmatprep.subr.mxu0 0.0
        %978 = vmatpush1.msra.mxu0 %v934
        %979 = vmatprep.subr.mxu0 0.0
        %980 = vmatpush1.msra.mxu0 %v933
        %981 = vmatprep.subr.mxu0 0.0
        %982 = vmatpush2.msra.mxu0 0.0
        %983 = vmatprep.subr.mxu0 0.0
        %984 = vmatpush2.msra.mxu0 0.0
        %985 = vmatprep.subr.mxu0 0.0
        %986 = vmatpush2.msra.mxu0 0.0
        %987 = vmatprep.subr.mxu0 0.0
        %988 = vmatpush2.msra.mxu0 0.0
        %989 = vmatprep.subr.mxu0 0.0
        %990 = vmatpush2.msra.mxu0 0.0
        %991 = vmatprep.subr.mxu0 0.0
        %992 = vmatpush2.msra.mxu0 0.0
        %993 = vmatprep.subr.mxu0 0.0
        %994 = vmatpush2.msra.mxu0 0.0
        %995 = vmatprep.subr.mxu0 0.0
        %996 = vmatpush2.msra.mxu0 0.0
        %997 = vmatprep.subr.mxu0 0.0
        %998 = vmatpush2.msra.mxu0 0.0
        %999 = vmatprep.subr.mxu0 0.0
        %1000 = vmatpush2.msra.mxu0 0.0
        %1001 = vmatprep.subr.mxu0 0.0
        %1002 = vmatpush2.msra.mxu0 0.0
        %1003 = vmatprep.subr.mxu0 0.0
        %1004 = vmatpush2.msra.mxu0 0.0
        %1005 = vmatprep.subr.mxu0 0.0
        %1006 = vmatpush2.msra.mxu0 0.0
        %1007 = vmatprep.subr.mxu0 0.0
        %1008 = vmatpush2.msra.mxu0 0.0
        %1009 = vmatprep.subr.mxu0 0.0
        %1010 = vmatpush2.msra.mxu0 0.0
        %1011 = vmatprep.subr.mxu0 0.0
        %1012 = vmatpush2.msra.mxu0 0.0
        %1013 = vmatprep.mubr.f32.mxu0 0.0
        %1014 = vmatmul.mubr.f32.gmra.mxu0 %v941
        %v1015 = vpop.f32.mrf.mxu0
        %v1016 = vadd.f32 0.0, %v1015
        %v1017 = vpop.f32.mrf.mxu0
        %1018 = vmatprep.mubr.f32.mxu0 0.0
        %1019 = vmatmul.mubr.f32.gmra.mxu0 %v944
        %v1020 = vpop.f32.mrf.mxu0
        %v1021 = vadd.f32 0.0, %v1020
        %v1022 = vpop.f32.mrf.mxu0
        %1023 = vmatprep.mubr.f32.mxu0 0.0
        %1024 = vmatmul.mubr.f32.gmra.mxu0 %v947
        %v1025 = vpop.f32.mrf.mxu0
        %v1026 = vadd.f32 0.0, %v1025
        %v1027 = vpop.f32.mrf.mxu0
        %1028 = vdwg.mxu0
        %v1029 = vmul.f32 %v1016, 0.5
        %v1030 = vmul.f32 %v1021, 0.5
        %v1031 = vmul.f32 %v1026, 0.5
        %v1032 = vtanh.pop %v1029
        %v1033 = vtanh.pop %v1030
        %v1034 = vtanh.pop %v1031
        %v1035 = vmul.f32 %v1032, 0.5
        %v1036 = vmul.f32 %v1033, 0.5
        %v1037 = vmul.f32 %v1034, 0.5
        %v1038 = vadd.f32 %v1035, 0.5
        %v1039 = vadd.f32 %v1036, 0.5
        %v1040 = vadd.f32 %v1037, 0.5
        %s1041 = scalar_lea.vmem %s3, 144
        %v1042 = vld [vmem:[%s1041] sm:$0xff]
        %v1043 = vld [vmem:[%s1041 + $0x8] sm:$0xff]
        %v1044 = vld [vmem:[%s1041 + $0x10] sm:$0xff]
        %v1046 = vsel %vm414, %v1042, 0
        %v1049 = vsel %vm414, %v1043, 0
        %v1052 = vsel %vm414, %v1044, 0
        %1054 = vmatprep.subr.mxu0 0.0
        %1055 = vmatpush1.msra.mxu0 0.0
        %1056 = vmatprep.subr.mxu0 0.0
        %1057 = vmatpush1.msra.mxu0 0.0
        %1058 = vmatprep.subr.mxu0 0.0
        %1059 = vmatpush1.msra.mxu0 0.0
        %1060 = vmatprep.subr.mxu0 0.0
        %1061 = vmatpush1.msra.mxu0 0.0
        %1062 = vmatprep.subr.mxu0 0.0
        %1063 = vmatpush1.msra.mxu0 0.0
        %1064 = vmatprep.subr.mxu0 0.0
        %1065 = vmatpush1.msra.mxu0 0.0
        %1066 = vmatprep.subr.mxu0 0.0
        %1067 = vmatpush1.msra.mxu0 0.0
        %1068 = vmatprep.subr.mxu0 0.0
        %1069 = vmatpush1.msra.mxu0 0.0
        %1070 = vmatprep.subr.mxu0 0.0
        %1071 = vmatpush1.msra.mxu0 0.0
        %1072 = vmatprep.subr.mxu0 0.0
        %1073 = vmatpush1.msra.mxu0 0.0
        %1074 = vmatprep.subr.mxu0 0.0
        %1075 = vmatpush1.msra.mxu0 0.0
        %1076 = vmatprep.subr.mxu0 0.0
        %1077 = vmatpush1.msra.mxu0 0.0
        %1078 = vmatprep.subr.mxu0 0.0
        %1079 = vmatpush1.msra.mxu0 0.0
        %1080 = vmatprep.subr.mxu0 0.0
        %1081 = vmatpush1.msra.mxu0 %v1040
        %1082 = vmatprep.subr.mxu0 0.0
        %1083 = vmatpush1.msra.mxu0 %v1039
        %1084 = vmatprep.subr.mxu0 0.0
        %1085 = vmatpush1.msra.mxu0 %v1038
        %1086 = vmatprep.subr.mxu0 0.0
        %1087 = vmatpush2.msra.mxu0 0.0
        %1088 = vmatprep.subr.mxu0 0.0
        %1089 = vmatpush2.msra.mxu0 0.0
        %1090 = vmatprep.subr.mxu0 0.0
        %1091 = vmatpush2.msra.mxu0 0.0
        %1092 = vmatprep.subr.mxu0 0.0
        %1093 = vmatpush2.msra.mxu0 0.0
        %1094 = vmatprep.subr.mxu0 0.0
        %1095 = vmatpush2.msra.mxu0 0.0
        %1096 = vmatprep.subr.mxu0 0.0
        %1097 = vmatpush2.msra.mxu0 0.0
        %1098 = vmatprep.subr.mxu0 0.0
        %1099 = vmatpush2.msra.mxu0 0.0
        %1100 = vmatprep.subr.mxu0 0.0
        %1101 = vmatpush2.msra.mxu0 0.0
        %1102 = vmatprep.subr.mxu0 0.0
        %1103 = vmatpush2.msra.mxu0 0.0
        %1104 = vmatprep.subr.mxu0 0.0
        %1105 = vmatpush2.msra.mxu0 0.0
        %1106 = vmatprep.subr.mxu0 0.0
        %1107 = vmatpush2.msra.mxu0 0.0
        %1108 = vmatprep.subr.mxu0 0.0
        %1109 = vmatpush2.msra.mxu0 0.0
        %1110 = vmatprep.subr.mxu0 0.0
        %1111 = vmatpush2.msra.mxu0 0.0
        %1112 = vmatprep.subr.mxu0 0.0
        %1113 = vmatpush2.msra.mxu0 0.0
        %1114 = vmatprep.subr.mxu0 0.0
        %1115 = vmatpush2.msra.mxu0 0.0
        %1116 = vmatprep.subr.mxu0 0.0
        %1117 = vmatpush2.msra.mxu0 0.0
        %1118 = vmatprep.mubr.f32.mxu0 0.0
        %1119 = vmatmul.mubr.f32.gmra.mxu0 %v1046
        %v1120 = vpop.f32.mrf.mxu0
        %v1121 = vadd.f32 0.0, %v1120
        %v1122 = vpop.f32.mrf.mxu0
        %1123 = vmatprep.mubr.f32.mxu0 0.0
        %1124 = vmatmul.mubr.f32.gmra.mxu0 %v1049
        %v1125 = vpop.f32.mrf.mxu0
        %v1126 = vadd.f32 0.0, %v1125
        %v1127 = vpop.f32.mrf.mxu0
        %1128 = vmatprep.mubr.f32.mxu0 0.0
        %1129 = vmatmul.mubr.f32.gmra.mxu0 %v1052
        %v1130 = vpop.f32.mrf.mxu0
        %v1131 = vadd.f32 0.0, %v1130
        %v1132 = vpop.f32.mrf.mxu0
        %1133 = vdwg.mxu0
        %v1134 = vmul.f32 %v1121, 0.5
        %v1135 = vmul.f32 %v1126, 0.5
        %v1136 = vmul.f32 %v1131, 0.5
        %v1137 = vtanh.pop %v1134
        %v1138 = vtanh.pop %v1135
        %v1139 = vtanh.pop %v1136
        %v1140 = vmul.f32 %v1137, 0.5
        %v1141 = vmul.f32 %v1138, 0.5
        %v1142 = vmul.f32 %v1139, 0.5
        %v1143 = vadd.f32 %v1140, 0.5
        %v1144 = vadd.f32 %v1141, 0.5
        %v1145 = vadd.f32 %v1142, 0.5
        %v1146 = vld [vmem:[%s4] sm:$0xff]
        %v1147 = vld [vmem:[%s4 + $0x8] sm:$0xff]
        %v1148 = vld [vmem:[%s4 + $0x10] sm:$0xff]
        %1150 = vset.pattern.permute.xlu0 0
        %1151 = vperm.xlu0 %1150, %v1146
        %v1152 = vpop.permute.xlu0 %1151
        %1155 = vset.pattern.permute.xlu0 0
        %1156 = vperm.xlu0 %1155, %v1147
        %v1157 = vpop.permute.xlu0 %1156
        %1160 = vset.pattern.permute.xlu0 0
        %1161 = vperm.xlu0 %1160, %v1148
        %v1162 = vpop.permute.xlu0 %1161
        %v1164 = vmul.f32 %v1152, %v1143
        %v1165 = vmul.f32 %v1157, %v1144
        %v1166 = vmul.f32 %v1162, %v1145
        %v1167 = vadd.f32 %v1164, %v1165
        %v1168 = vadd.f32 %v1167, %v1166
        %v1169 = vrot.slane %v1168, 4
        %v1170 = vadd.f32 %v1168, %v1169
        %v1171 = vrot.slane %v1170, 2
        %v1172 = vadd.f32 %v1170, %v1171
        %v1173 = vrot.slane %v1172, 1
        %v1174 = vadd.f32 %v1172, %v1173
        %v1175 = vmul.f32 %v1174, 0.5
        %v1176 = vtanh.pop %v1175
        %v1177 = vmul.f32 %v1176, 0.5
        %v1178 = vadd.f32 %v1177, 0.5
        %1179 = vst [vmem:[%s217] sm:$0x1] %v1178
        %s1180 = sand.u32 %s137, 1
        %s1181 = scalar_lea.sflag [#allocation3], %s1180
        %s1182 = sand.u32 %s137, 1
        %s1183 = scalar_lea.vmem [#allocation2], %s1182
        // Predicated region
        $region41: #{tpu_custom_call.1} parent=39 // pred_check
          %p1184 = pneg %p147
        $region42: #{tpu_custom_call.1} parent=39 // pred_check_branch
          %1186 = sbr.rel (%p1184) target = $region44
        $region43: #{tpu_custom_call.1} parent=39 // pred_region
          %s1188 = ssub.s32 16, 16
          %1189 = vsyncadd %s1181, %s1188
          %s1190 = smul.addr %s19, 16
          %s1191 = scalar_lea.hbm %s5, %s1190
          %s1193 = sshll.u32 %s1183, 4
          %s1194 = int_to_ptr.vmem [resolvable:$true] %s1193
          %1196 = dma.vmem_to_hbm [thread:$0]  %s1194, 16, %s1191, %s1181
        $region44: #{tpu_custom_call.1} parent=39 // pred_fallthru
          _
      $region40: #{tpu_custom_call.1} parent=5 // pred_fallthru
        _
      %p1197 = scmp.le.s32.totalorder 2, %s14
      // Predicated region
      $region45: #{tpu_custom_call.1} parent=5 // pred_check
        %p1198 = pneg %p1197
      $region46: #{tpu_custom_call.1} parent=5 // pred_check_branch
        %1200 = sbr.rel (%p1198) target = $region48
      $region47: #{tpu_custom_call.1} parent=5 // pred_region
        %s1201 = ssub.s32 %s14, 2
        // Predicated region
        $region49: #{tpu_custom_call.1} parent=47 // pred_check
          %p1202 = pneg %p153
        $region50: #{tpu_custom_call.1} parent=47 // pred_check_branch
          %1204 = sbr.rel (%p1202) target = $region52
        $region51: #{tpu_custom_call.1} parent=47 // pred_region
          %s1205 = sand.u32 %s138, 1
          %s1206 = scalar_lea.sflag [#allocation3], %s1205
          %s1207 = sand.u32 %s138, 1
          %s1208 = scalar_lea.vmem [#allocation2], %s1207
          %1209 = dma.done %s1206, 16
        $region52: #{tpu_custom_call.1} parent=47 // pred_fallthru
          _
      $region48: #{tpu_custom_call.1} parent=5 // pred_fallthru
        _
    $region6: #{tpu_custom_call.1} parent=1 // loop_footer
      %s18 = sadd.s32 1, %s14
    $region7: #{tpu_custom_call.1} parent=1 // loop_footer_branch
      %13 = sbr.rel target = $region3
    $region8: #{tpu_custom_call.1} parent=1 // loop_exit
      _
    %1210 = vsyncpa [#allocation3], 1
    %s1211 = scalar_lea.sflag [#allocation3], 1
    %1212 = vsyncpa %s1211, 1

</llo_original>
